<compile_context>
chip_gen: v7x
topology: tpu7x:2x2x1
jax: 0.10.0
libtpu: 0.0.40
codegen_flags: <defaults>
</compile_context>

<pallas_src>
from functools import partial

import jax
import jax.numpy as jnp
from jax.experimental import pallas as pl
from jax.experimental.pallas import tpu as pltpu


def _round_up(a, m):
    return (a + m - 1) // m * m


def _tpu_vmem_capacity_bytes():
    # Guarded hardware query; fall back to the smallest modern per-core VMEM.
    try:
        get_info = getattr(pltpu, "get_tpu_info", None)
        if get_info is not None:
            cap = getattr(get_info(), "vmem_capacity_bytes", None)
            if cap:
                return int(cap)
    except Exception:
        pass
    return 64 * 1024 * 1024  # v7x per-TensorCore physical VMEM


def _cores_per_chip():
    # Only 2-TC parts benefit from forcing >=2 grid steps on the batch axis.
    try:
        kind = getattr(jax.devices()[0], "device_kind", "").lower()
    except Exception:
        return 1
    if "v7" in kind:
        return 2
    if "v4" in kind and "lite" not in kind:
        return 2
    if "v5" in kind and "lite" not in kind and "5e" not in kind:
        return 2  # v5p-class
    return 1


def _pick_batch_block(B, C, L, n_pos, pad, itemsize):
    """Choose the batch block size and an explicit VMEM limit.

    Footprints account for (8,128) tile padding of the last two dims and for
    the live f32 intermediates inside the kernel (padded buffer, scan buffer,
    rolled temp, upper/lower, iota), not just raw element counts.
    """
    L_pad = L + 2 * pad
    L_al = _round_up(L_pad, 128)

    sub_tile = 8 * max(1, 4 // max(itemsize, 1))      # 8 (f32) / 16 (bf16) / 32 (i8)
    in_row = _round_up(C, sub_tile) * _round_up(L, 128) * itemsize
    out_row = _round_up(C, sub_tile) * _round_up(n_pos, 128) * itemsize
    f32_row = _round_up(C, 8) * L_al * 4
    LIVE_F32 = 6                                      # xp/csum, rolled tmp, upper, lower, iota, slack
    per_batch = 2 * in_row + 2 * out_row + LIVE_F32 * f32_row

    cap = _tpu_vmem_capacity_bytes()
    budget = min(max(8 << 20, int(cap * 0.5)), 48 << 20)
    tb = max(1, min(B, budget // max(per_batch, 1)))

    if _cores_per_chip() >= 2 and B >= 2:
        tb = min(tb, -(-B // 2))                      # >=2 grid steps -> both TCs busy

    vmem_limit = int(min(cap - (2 << 20),
                         max(32 << 20, tb * per_batch + (4 << 20))))
    vmem_limit = max(vmem_limit, 16 << 20)
    return tb, vmem_limit


def _moving_avg_kernel(x_ref, o_ref, *, kernel_size, pad, n_pos):
    # Block layout: (TB, C, L) -> channels on sublanes, time on lanes.
    TB, C, L = x_ref.shape
    K = kernel_size
    L_pad = L + 2 * pad
    L_al = _round_up(L_pad, 128)                      # lane-aligned working length

    x = x_ref[...].astype(jnp.float32)

    # Fused replicate-edge padding + lane alignment: built once in VMEM with a
    # single lane-axis concat; the padded sequence never touches HBM.
    parts = []
    if pad > 0:
        parts.append(jnp.broadcast_to(x[:, :, 0:1], (TB, C, pad)))
    parts.append(x)
    if pad > 0:
        parts.append(jnp.broadcast_to(x[:, :, L - 1:L], (TB, C, pad)))
    if L_al > L_pad:
        parts.append(jnp.zeros((TB, C, L_al - L_pad), jnp.float32))
    xp = parts[0] if len(parts) == 1 else jnp.concatenate(parts, axis=2)

    def shift_left(v, k):
        # result[t] = v[t + k]; wrap-around only lands at t >= L_al - k, which
        # is past every position we keep (t < n_pos <= L_pad - k).
        return pltpu.roll(v, (L_al - k) % L_al, axis=2)

    if K <= 16:
        # Small window: K-1 lane rolls (XLU) + adds, no unaligned slices.
        acc = xp
        for k in range(1, K):
            acc = acc + shift_left(xp, k)
    else:
        # Large window: Hillis-Steele inclusive prefix sum along lanes using
        # roll + select (one live buffer, no per-step concats), then each
        # window sum is a difference of two shifted prefix sums.
        lane = jax.lax.broadcasted_iota(jnp.int32, (TB, C, L_al), 2)
        csum = xp
        shift = 1
        while shift < L_pad:
            shifted = pltpu.roll(csum, shift, axis=2)          # [t] <- csum[t - shift]
            csum = csum + jnp.where(lane >= shift, shifted, 0.0)
            shift *= 2
        upper = shift_left(csum, K - 1)                        # csum[t + K - 1]
        lower = jnp.where(lane >= 1, pltpu.roll(csum, 1, axis=2), 0.0)  # csum[t - 1]
        acc = upper - lower
        # TODO(synk): for very long L use a blocked/segmented prefix sum to
        # bound cancellation error of the difference-of-prefix-sums form.

    o_ref[...] = (acc[:, :, :n_pos] / K).astype(o_ref.dtype)


def moving_avg(x, kernel_size, stride):
    """x: (B, L, C) -> (B, L_out, C), matching the PyTorch moving_avg module."""
    B, L, C = x.shape
    pad = (kernel_size - 1) // 2
    L_pad = L + 2 * pad
    n_pos = L_pad - kernel_size + 1                   # stride-1 window positions
    out_len = (L_pad - kernel_size) // stride + 1

    # Lane-dense layout: time on lanes, channels on sublanes.  One XLA
    # transpose each way; every in-kernel load/add/roll/store then runs at
    # high lane utilisation even for C << 128, and DMA rows are dense.
    # TODO(synk): for C >= 128 (already lane-dense) or to drop the two
    # transposes entirely, a flattened (B, L*C) layout with rolls of k*C is
    # the zero-extra-HBM-pass variant.
    xt = jnp.transpose(x, (0, 2, 1))                  # (B, C, L)

    TB, vmem_limit = _pick_batch_block(
        B, C, L, n_pos, pad, jnp.dtype(x.dtype).itemsize)
    num_blocks = pl.cdiv(B, TB)                       # ragged last block is fine

    kernel = partial(_moving_avg_kernel,
                     kernel_size=kernel_size, pad=pad, n_pos=n_pos)

    # TODO(synk): for very long sequences additionally tile the time axis with
    # a halo of 2*pad + K - 1 so VMEM stays bounded independent of L (matters
    # most on v7x's 64 MiB VMEM).
    out_t = pl.pallas_call(
        kernel,
        out_shape=jax.ShapeDtypeStruct((B, C, n_pos), x.dtype),
        grid=(num_blocks,),
        in_specs=[pl.BlockSpec((TB, C, L), lambda b: (b, 0, 0))],
        out_specs=pl.BlockSpec((TB, C, n_pos), lambda b: (b, 0, 0)),
        compiler_params=pltpu.CompilerParams(
            dimension_semantics=("parallel",),
            vmem_limit_bytes=vmem_limit),
    )(xt)

    out = jnp.transpose(out_t, (0, 2, 1))             # (B, n_pos, C)
    if stride > 1:
        # TODO(synk): stride > 1 is unused by TS3Net; subsample the stride-1
        # window means outside the kernel instead of strided lane extracts.
        out = out[:, ::stride, :][:, :out_len, :]
    return out


def _reference_moving_avg(x, kernel_size, stride):
    # Pure-JAX reference mirroring the PyTorch module exactly.
    pad = (kernel_size - 1) // 2
    front = jnp.repeat(x[:, 0:1, :], pad, axis=1)
    end = jnp.repeat(x[:, -1:, :], pad, axis=1)
    xp = jnp.concatenate([front, x, end], axis=1)
    L_pad = xp.shape[1]
    out_len = (L_pad - kernel_size) // stride + 1
    return jnp.stack(
        [xp[:, t * stride:t * stride + kernel_size, :].mean(axis=1)
         for t in range(out_len)],
        axis=1,
    )


if __name__ == "__main__":
    ok = True
    configs = [
        # (B, L, C, K, S)
        (2, 16, 32, 5, 1),    # small-K unrolled roll path
        (2, 96, 7, 25, 1),    # typical decomposition window -> prefix-sum path
        (2, 32, 5, 4, 2),     # even K + stride > 1 (wrapper subsample)
    ]
    for (B, L, C, K, S) in configs:
        x = jax.random.normal(jax.random.PRNGKey(0), (B, L, C), dtype=jnp.float32)
        out = jax.block_until_ready(moving_avg(x, K, S))
        ref = _reference_moving_avg(x, K, S)
        ok &= out.shape == ref.shape
        ok &= bool(jnp.allclose(out, ref, atol=1e-4, rtol=1e-4))

    assert ok, "mismatch vs reference"
    print("KERNEL_OK")
</pallas_src>

<mosaic_0001>
module attributes {stable_mosaic.version = 11 : i64} {
  func.func @_moving_avg_kernel(%arg0: i32, %arg1: memref<2x32x16xf32, #tpu.memory_space<vmem>>, %arg2: memref<2x32x16xf32, #tpu.memory_space<vmem>>) attributes {dimension_semantics = [#tpu.dimension_semantics<parallel>], iteration_bounds = array<i64: 1>, scalar_prefetch = 0 : i64, scratch_operands = 0 : i64, tpu.core_type = #tpu.core_type<tc>, window_params = [{transform_indices = @transform_0, window_bounds = array<i64: 2, 32, 16>}, {transform_indices = @transform_1, window_bounds = array<i64: 2, 32, 16>}]} {
    %c0 = arith.constant 0 : index
    %c0_0 = arith.constant 0 : index
    %c0_1 = arith.constant 0 : index
    %0 = vector.load %arg1[%c0, %c0_0, %c0_1] : memref<2x32x16xf32, #tpu.memory_space<vmem>>, vector<2x32x16xf32>
    %1 = vector.extract_strided_slice %0 {offsets = [0, 0, 0], sizes = [2, 32, 1], strides = [1, 1, 1]} : vector<2x32x16xf32> to vector<2x32x1xf32>
    %2 = vector.shape_cast %1 : vector<2x32x1xf32> to vector<2x32x1xf32>
    %3 = vector.broadcast %2 : vector<2x32x1xf32> to vector<2x32x2xf32>
    %4 = vector.extract_strided_slice %0 {offsets = [0, 0, 15], sizes = [2, 32, 1], strides = [1, 1, 1]} : vector<2x32x16xf32> to vector<2x32x1xf32>
    %5 = vector.shape_cast %4 : vector<2x32x1xf32> to vector<2x32x1xf32>
    %6 = vector.broadcast %5 : vector<2x32x1xf32> to vector<2x32x2xf32>
    %cst = arith.constant 0.000000e+00 : f32
    %7 = vector.broadcast %cst : f32 to vector<2x32x108xf32>
    %8 = tpu.concatenate %3, %0, %6, %7 in 2 : vector<2x32x2xf32>, vector<2x32x16xf32>, vector<2x32x2xf32>, vector<2x32x108xf32> -> vector<2x32x128xf32>
    %c127_i32 = arith.constant 127 : i32
    %9 = tpu.dynamic_rotate %8 by %c127_i32 dim 2 : vector<2x32x128xf32>, i32 -> vector<2x32x128xf32>
    %10 = arith.addf %8, %9 : vector<2x32x128xf32>
    %c126_i32 = arith.constant 126 : i32
    %11 = tpu.dynamic_rotate %8 by %c126_i32 dim 2 : vector<2x32x128xf32>, i32 -> vector<2x32x128xf32>
    %12 = arith.addf %10, %11 : vector<2x32x128xf32>
    %c125_i32 = arith.constant 125 : i32
    %13 = tpu.dynamic_rotate %8 by %c125_i32 dim 2 : vector<2x32x128xf32>, i32 -> vector<2x32x128xf32>
    %14 = arith.addf %12, %13 : vector<2x32x128xf32>
    %c124_i32 = arith.constant 124 : i32
    %15 = tpu.dynamic_rotate %8 by %c124_i32 dim 2 : vector<2x32x128xf32>, i32 -> vector<2x32x128xf32>
    %16 = arith.addf %14, %15 : vector<2x32x128xf32>
    %17 = vector.extract_strided_slice %16 {offsets = [0, 0, 0], sizes = [2, 32, 16], strides = [1, 1, 1]} : vector<2x32x128xf32> to vector<2x32x16xf32>
    %cst_2 = arith.constant 5.000000e+00 : f32
    %18 = vector.broadcast %cst_2 : f32 to vector<2x32x16xf32>
    %19 = arith.divf %17, %18 : vector<2x32x16xf32>
    %c0_3 = arith.constant 0 : index
    %c0_4 = arith.constant 0 : index
    %c0_5 = arith.constant 0 : index
    %20 = vector.load %arg2[%c0_3, %c0_4, %c0_5] : memref<2x32x16xf32, #tpu.memory_space<vmem>>, vector<2x32x16xf32>
    tpu.vector_store %arg2[%c0_3, %c0_4, %c0_5], %19 {strides = array<i32>} : memref<2x32x16xf32, #tpu.memory_space<vmem>>, vector<2x32x16xf32>,
    return
  }
  func.func @transform_0(%arg0: i32) -> (i32, i32, i32) {
    %c0_i32 = arith.constant 0 : i32
    %c0_i32_0 = arith.constant 0 : i32
    %c0_i32_1 = arith.constant 0 : i32
    return %arg0, %c0_i32, %c0_i32_0 : i32, i32, i32
  }
  func.func @transform_1(%arg0: i32) -> (i32, i32, i32) {
    %c0_i32 = arith.constant 0 : i32
    %c0_i32_0 = arith.constant 0 : i32
    %c0_i32_1 = arith.constant 0 : i32
    return %arg0, %c0_i32, %c0_i32_0 : i32, i32, i32
  }
}

</mosaic_0001>

<llo_original>
// kernel: tpu_custom_call.1
$region0: #{tpu_custom_call.1}
  #allocation0 [shape = 'u32[]', space=smem, size = 0x4, offset = 0x4, fixed_abs, tag = 'smem constant byte address 0x4 - core index']
  #allocation1 [shape = 'u32[144,128]{1,0:T(1,128)}', space=vmem, size = 0x12000, scoped, tag = 'internal scratch']
  %s0 = inlined_call_operand.vmem [shape: f32[2,32,16], index: 0, kind: input, shape index: {}]
  %s1 = inlined_call_operand.vmem [shape: f32[2,32,16], index: 1, kind: output, shape index: {}]
  %s2 = sld [smem:[#allocation0]]
  $region14: #{tpu_custom_call.1} parent=0
    _
  %s4 = ssub.s32 1, %s2
  %s5 = scalar_select 0, %s4, %s2
  // Predicated region
  $region2: #{tpu_custom_call.1} parent=0 // pred_check
    _
  $region3: #{tpu_custom_call.1} parent=0 // pred_check_branch
    %7 = sbr.rel (0) target = $region5
  $region4: #{tpu_custom_call.1} parent=0 // pred_region
    _
  $region5: #{tpu_custom_call.1} parent=0 // pred_fallthru
    _
  %v8 = vld [vmem:[%s0] sm:$0xff]
  %v9 = vld [vmem:[%s0 + $0x8] sm:$0xff]
  %v10 = vld [vmem:[%s0 + $0x10] sm:$0xff]
  %v11 = vld [vmem:[%s0 + $0x18] sm:$0xff]
  %v12 = vld [vmem:[%s0 + $0x20] sm:$0xff]
  %v13 = vld [vmem:[%s0 + $0x28] sm:$0xff]
  %v14 = vld [vmem:[%s0 + $0x30] sm:$0xff]
  %v15 = vld [vmem:[%s0 + $0x38] sm:$0xff]
  %17 = vset.pattern.permute.xlu0 0
  %18 = vperm.xlu0 %17, %v8
  %v19 = vpop.permute.xlu0 %18
  %22 = vset.pattern.permute.xlu0 0
  %23 = vperm.xlu0 %22, %v9
  %v24 = vpop.permute.xlu0 %23
  %27 = vset.pattern.permute.xlu0 0
  %28 = vperm.xlu0 %27, %v10
  %v29 = vpop.permute.xlu0 %28
  %32 = vset.pattern.permute.xlu0 0
  %33 = vperm.xlu0 %32, %v11
  %v34 = vpop.permute.xlu0 %33
  %37 = vset.pattern.permute.xlu0 0
  %38 = vperm.xlu0 %37, %v12
  %v39 = vpop.permute.xlu0 %38
  %42 = vset.pattern.permute.xlu0 0
  %43 = vperm.xlu0 %42, %v13
  %v44 = vpop.permute.xlu0 %43
  %47 = vset.pattern.permute.xlu0 0
  %48 = vperm.xlu0 %47, %v14
  %v49 = vpop.permute.xlu0 %48
  %52 = vset.pattern.permute.xlu0 0
  %53 = vperm.xlu0 %52, %v15
  %v54 = vpop.permute.xlu0 %53
  %56 = vset.pattern.permute.xlu0 15
  %57 = vperm.xlu0 %56, %v8
  %v58 = vpop.permute.xlu0 %57
  %60 = vset.pattern.permute.xlu0 15
  %61 = vperm.xlu0 %60, %v9
  %v62 = vpop.permute.xlu0 %61
  %64 = vset.pattern.permute.xlu0 15
  %65 = vperm.xlu0 %64, %v10
  %v66 = vpop.permute.xlu0 %65
  %68 = vset.pattern.permute.xlu0 15
  %69 = vperm.xlu0 %68, %v11
  %v70 = vpop.permute.xlu0 %69
  %72 = vset.pattern.permute.xlu0 15
  %73 = vperm.xlu0 %72, %v12
  %v74 = vpop.permute.xlu0 %73
  %76 = vset.pattern.permute.xlu0 15
  %77 = vperm.xlu0 %76, %v13
  %v78 = vpop.permute.xlu0 %77
  %80 = vset.pattern.permute.xlu0 15
  %81 = vperm.xlu0 %80, %v14
  %v82 = vpop.permute.xlu0 %81
  %84 = vset.pattern.permute.xlu0 15
  %85 = vperm.xlu0 %84, %v15
  %v86 = vpop.permute.xlu0 %85
  %88 = vrot.lane.b32.xlu0 %v8, 2
  %v89 = vpop.permute.xlu0 %88
  %90 = vrot.lane.b32.xlu0 %v9, 2
  %v91 = vpop.permute.xlu0 %90
  %92 = vrot.lane.b32.xlu0 %v10, 2
  %v93 = vpop.permute.xlu0 %92
  %94 = vrot.lane.b32.xlu0 %v11, 2
  %v95 = vpop.permute.xlu0 %94
  %96 = vrot.lane.b32.xlu0 %v12, 2
  %v97 = vpop.permute.xlu0 %96
  %98 = vrot.lane.b32.xlu0 %v13, 2
  %v99 = vpop.permute.xlu0 %98
  %100 = vrot.lane.b32.xlu0 %v14, 2
  %v101 = vpop.permute.xlu0 %100
  %102 = vrot.lane.b32.xlu0 %v15, 2
  %v103 = vpop.permute.xlu0 %102
  %vm112 = vcmask 15360
  %v113 = vsel %vm112, %v19, %v89
  %v114 = vsel %vm112, %v24, %v91
  %v115 = vsel %vm112, %v29, %v93
  %v116 = vsel %vm112, %v34, %v95
  %v117 = vsel %vm112, %v39, %v97
  %v118 = vsel %vm112, %v44, %v99
  %v119 = vsel %vm112, %v49, %v101
  %v120 = vsel %vm112, %v54, %v103
  %vm121 = vcmask 146432
  %v122 = vsel %vm121, %v113, %v58
  %v123 = vsel %vm121, %v114, %v62
  %v124 = vsel %vm121, %v115, %v66
  %v125 = vsel %vm121, %v116, %v70
  %v126 = vsel %vm121, %v117, %v74
  %v127 = vsel %vm121, %v118, %v78
  %v128 = vsel %vm121, %v119, %v82
  %v129 = vsel %vm121, %v120, %v86
  %vm130 = vcmask 162816
  %v131 = vsel %vm130, %v122, 0.0
  %v132 = vsel %vm130, %v123, 0.0
  %v133 = vsel %vm130, %v124, 0.0
  %v134 = vsel %vm130, %v125, 0.0
  %v135 = vsel %vm130, %v126, 0.0
  %v136 = vsel %vm130, %v127, 0.0
  %v137 = vsel %vm130, %v128, 0.0
  %v138 = vsel %vm130, %v129, 0.0
  %139 = vrot.lane.b32.xlu0 %v131, 127
  %v140 = vpop.permute.xlu0 %139
  %141 = vrot.lane.b32.xlu0 %v132, 127
  %v142 = vpop.permute.xlu0 %141
  %143 = vrot.lane.b32.xlu0 %v133, 127
  %v144 = vpop.permute.xlu0 %143
  %145 = vrot.lane.b32.xlu0 %v134, 127
  %v146 = vpop.permute.xlu0 %145
  %147 = vrot.lane.b32.xlu0 %v135, 127
  %v148 = vpop.permute.xlu0 %147
  %149 = vrot.lane.b32.xlu0 %v136, 127
  %v150 = vpop.permute.xlu0 %149
  %151 = vrot.lane.b32.xlu0 %v137, 127
  %v152 = vpop.permute.xlu0 %151
  %153 = vrot.lane.b32.xlu0 %v138, 127
  %v154 = vpop.permute.xlu0 %153
  %v155 = vadd.f32 %v131, %v140
  %v156 = vadd.f32 %v132, %v142
  %v157 = vadd.f32 %v133, %v144
  %v158 = vadd.f32 %v134, %v146
  %v159 = vadd.f32 %v135, %v148
  %v160 = vadd.f32 %v136, %v150
  %v161 = vadd.f32 %v137, %v152
  %v162 = vadd.f32 %v138, %v154
  %163 = vrot.lane.b32.xlu0 %v131, 126
  %v164 = vpop.permute.xlu0 %163
  %165 = vrot.lane.b32.xlu0 %v132, 126
  %v166 = vpop.permute.xlu0 %165
  %167 = vrot.lane.b32.xlu0 %v133, 126
  %v168 = vpop.permute.xlu0 %167
  %169 = vrot.lane.b32.xlu0 %v134, 126
  %v170 = vpop.permute.xlu0 %169
  %171 = vrot.lane.b32.xlu0 %v135, 126
  %v172 = vpop.permute.xlu0 %171
  %173 = vrot.lane.b32.xlu0 %v136, 126
  %v174 = vpop.permute.xlu0 %173
  %175 = vrot.lane.b32.xlu0 %v137, 126
  %v176 = vpop.permute.xlu0 %175
  %177 = vrot.lane.b32.xlu0 %v138, 126
  %v178 = vpop.permute.xlu0 %177
  %v179 = vadd.f32 %v155, %v164
  %v180 = vadd.f32 %v156, %v166
  %v181 = vadd.f32 %v157, %v168
  %v182 = vadd.f32 %v158, %v170
  %v183 = vadd.f32 %v159, %v172
  %v184 = vadd.f32 %v160, %v174
  %v185 = vadd.f32 %v161, %v176
  %v186 = vadd.f32 %v162, %v178
  %187 = vrot.lane.b32.xlu0 %v131, 125
  %v188 = vpop.permute.xlu0 %187
  %189 = vrot.lane.b32.xlu0 %v132, 125
  %v190 = vpop.permute.xlu0 %189
  %191 = vrot.lane.b32.xlu0 %v133, 125
  %v192 = vpop.permute.xlu0 %191
  %193 = vrot.lane.b32.xlu0 %v134, 125
  %v194 = vpop.permute.xlu0 %193
  %195 = vrot.lane.b32.xlu0 %v135, 125
  %v196 = vpop.permute.xlu0 %195
  %197 = vrot.lane.b32.xlu0 %v136, 125
  %v198 = vpop.permute.xlu0 %197
  %199 = vrot.lane.b32.xlu0 %v137, 125
  %v200 = vpop.permute.xlu0 %199
  %201 = vrot.lane.b32.xlu0 %v138, 125
  %v202 = vpop.permute.xlu0 %201
  %v203 = vadd.f32 %v179, %v188
  %v204 = vadd.f32 %v180, %v190
  %v205 = vadd.f32 %v181, %v192
  %v206 = vadd.f32 %v182, %v194
  %v207 = vadd.f32 %v183, %v196
  %v208 = vadd.f32 %v184, %v198
  %v209 = vadd.f32 %v185, %v200
  %v210 = vadd.f32 %v186, %v202
  %211 = vrot.lane.b32.xlu0 %v131, 124
  %v212 = vpop.permute.xlu0 %211
  %213 = vrot.lane.b32.xlu0 %v132, 124
  %v214 = vpop.permute.xlu0 %213
  %215 = vrot.lane.b32.xlu0 %v133, 124
  %v216 = vpop.permute.xlu0 %215
  %217 = vrot.lane.b32.xlu0 %v134, 124
  %v218 = vpop.permute.xlu0 %217
  %219 = vrot.lane.b32.xlu0 %v135, 124
  %v220 = vpop.permute.xlu0 %219
  %221 = vrot.lane.b32.xlu0 %v136, 124
  %v222 = vpop.permute.xlu0 %221
  %223 = vrot.lane.b32.xlu0 %v137, 124
  %v224 = vpop.permute.xlu0 %223
  %225 = vrot.lane.b32.xlu0 %v138, 124
  %v226 = vpop.permute.xlu0 %225
  %v227 = vadd.f32 %v203, %v212
  %v228 = vadd.f32 %v204, %v214
  %v229 = vadd.f32 %v205, %v216
  %v230 = vadd.f32 %v206, %v218
  %v231 = vadd.f32 %v207, %v220
  %v232 = vadd.f32 %v208, %v222
  %v233 = vadd.f32 %v209, %v224
  %v234 = vadd.f32 %v210, %v226
  %v235 = vrcp.pop 5.0
  %v236 = vmul.f32 %v227, %v235
  %v237 = vmul.f32 %v228, %v235
  %v238 = vmul.f32 %v229, %v235
  %v239 = vmul.f32 %v230, %v235
  %v240 = vmul.f32 %v231, %v235
  %v241 = vmul.f32 %v232, %v235
  %v242 = vmul.f32 %v233, %v235
  %v243 = vmul.f32 %v234, %v235
  %vm244 = vcmask 130048
  %245 = vst.msk [vmem:[%s1] sm:$0xff] %vm244, %v236
  %246 = vst.msk [vmem:[%s1 + $0x8] sm:$0xff] %vm244, %v237
  %247 = vst.msk [vmem:[%s1 + $0x10] sm:$0xff] %vm244, %v238
  %248 = vst.msk [vmem:[%s1 + $0x18] sm:$0xff] %vm244, %v239
  %249 = vst.msk [vmem:[%s1 + $0x20] sm:$0xff] %vm244, %v240
  %250 = vst.msk [vmem:[%s1 + $0x28] sm:$0xff] %vm244, %v241
  %251 = vst.msk [vmem:[%s1 + $0x30] sm:$0xff] %vm244, %v242
  %252 = vst.msk [vmem:[%s1 + $0x38] sm:$0xff] %vm244, %v243
  // Predicated region
  $region6: #{tpu_custom_call.1} parent=0 // pred_check
    _
  $region7: #{tpu_custom_call.1} parent=0 // pred_check_branch
    %254 = sbr.rel (0) target = $region9
  $region8: #{tpu_custom_call.1} parent=0 // pred_region
    _
  $region9: #{tpu_custom_call.1} parent=0 // pred_fallthru
    _
  // Predicated region
  $region10: #{tpu_custom_call.1} parent=0 // pred_check
    _
  $region11: #{tpu_custom_call.1} parent=0 // pred_check_branch
    %256 = sbr.rel (0) target = $region13
  $region12: #{tpu_custom_call.1} parent=0 // pred_region
    _
  $region13: #{tpu_custom_call.1} parent=0 // pred_fallthru
    _

</llo_original>
